<compile_context>
chip_gen: v7x
topology: tpu7x:2x2x1
jax: 0.10.0
libtpu: 0.0.40
codegen_flags: <defaults>
</compile_context>

<pallas_src>
import functools

import jax
import jax.numpy as jnp
from jax.experimental import pallas as pl
from jax.experimental.pallas import tpu as pltpu

_LANES = 128
_SUBLANE = {4: 8, 2: 16, 1: 32}  # sublane packing per itemsize


def _mish_kernel(x_ref, o_ref):
    """Elementwise Mish in f32.

    Uses the rational identity
        tanh(softplus(x)) = (e^{2x} + 2 e^x) / (e^{2x} + 2 e^x + 2)
    rewritten with t = exp(-|x|) and a sign select, so only ONE transcendental
    (exp) is needed and nothing overflows for large |x|.  The divide is done
    with the EUP approximate reciprocal plus one Newton step (cheaper on the
    VALU than a full-precision divide, accurate to ~2^-24).
    """
    x = x_ref[...].astype(jnp.float32)
    t = jnp.exp(-jnp.abs(x))                 # EUP: the only transcendental
    pos = x >= 0.0
    t2 = t + t
    tt = t * t
    num = jnp.where(pos, 1.0 + t2, tt + t2)          # x>=0: 1+2t   | x<0: t^2+2t
    den = num + 2.0 * jnp.where(pos, tt, 1.0)        # x>=0: +2t^2  | x<0: +2
    r = pl.reciprocal(den, approx=True)               # EUP vrcp (~12 bit)
    r = r * (2.0 - den * r)                            # one Newton step -> ~24 bit
    o_ref[...] = (x * num * r).astype(o_ref.dtype)


@functools.lru_cache(maxsize=1)
def _vmem_budget_bytes() -> int:
    """Generation-aware VMEM budget (half of physical VMEM per TensorCore)."""
    try:
        cap = int(pltpu.get_tpu_info().vmem_capacity_bytes)
    except Exception:
        cap = 64 * 1024 * 1024  # conservative default == v7x physical VMEM
    # 64 MiB budget on v5e/v6e (128 MiB VMEM), 32 MiB on v7x (64 MiB VMEM).
    return max(16 * 1024 * 1024, cap // 2)


def _mish_call(x2d, block_shape, grid, vmem_limit, donate):
    return pl.pallas_call(
        _mish_kernel,
        out_shape=jax.ShapeDtypeStruct(x2d.shape, x2d.dtype),
        grid_spec=pltpu.PrefetchScalarGridSpec(
            num_scalar_prefetch=0,
            grid=grid,
            # If an xprof trace on v7x ever shows exposed DMA, add
            # pipeline_mode=pl.Buffered(3) to this input spec.
            in_specs=[pl.BlockSpec(block_shape, lambda i: (i, 0))],
            out_specs=pl.BlockSpec(block_shape, lambda i: (i, 0)),
        ),
        compiler_params=pltpu.CompilerParams(
            dimension_semantics=("parallel",),  # shards the grid across TCs on v7x
            vmem_limit_bytes=int(vmem_limit),
        ),
        input_output_aliases=({0: 0} if donate else {}),
    )(x2d)


def mish(x: jax.Array, *, block_rows: int = 8192, donate: bool = False) -> jax.Array:
    """Elementwise Mish. Accepts any shape (e.g. NCHW); preserves shape/dtype.

    Set donate=True when the caller can donate `x` (in-place update via
    input_output_aliases) to avoid a separate output allocation.
    """
    orig_shape = x.shape
    n = x.size
    if n == 0:
        return x

    itemsize = jnp.dtype(x.dtype).itemsize
    sublane = _SUBLANE.get(itemsize, 8)
    cap = _vmem_budget_bytes()
    headroom = 8 * 1024 * 1024

    flat = x.reshape(-1)

    if n % _LANES == 0:
        # Common case (conv / NCHW activations): zero-copy lane-dense view.
        rows = n // _LANES
        x2d = flat.reshape(rows, _LANES)

        tile_rows = min(block_rows, rows)
        # For larger tensors keep >= 4 grid steps: preserves DMA/compute
        # overlap and gives each v7x TensorCore at least 2 blocks.
        if rows >= 4 * 512:
            tile_rows = min(tile_rows, pl.cdiv(rows, 4))
        # Clamp so (2 in + 2 out) double-buffered blocks + headroom fit the
        # generation-aware VMEM budget (matters on v7x's 64 MiB VMEM).
        max_tile_rows = (cap - headroom) // (4 * _LANES * itemsize)
        tile_rows = min(tile_rows, max_tile_rows)
        tile_rows = max(sublane, (tile_rows // sublane) * sublane)

        # Non-divisible grids are fine: the last (partial) block is masked by
        # Pallas, so no padding / slicing copies are ever needed here.
        grid = (pl.cdiv(rows, tile_rows),)
        block_bytes = tile_rows * _LANES * itemsize
        vmem_limit = min(cap, max(16 * 1024 * 1024, 4 * block_bytes + headroom))

        out2d = _mish_call(x2d, (tile_rows, _LANES), grid, vmem_limit, donate)
        return out2d.reshape(orig_shape)

    if n * itemsize <= 256 * 1024:
        # Lane-unaligned but small: one full-array (1, n) block (block shape
        # equal to the array shape is always legal) — still zero-copy.
        out2d = _mish_call(flat.reshape(1, n), (1, n), (1,),
                           min(cap, 32 * 1024 * 1024), donate)
        return out2d.reshape(orig_shape)

    # Rare: large AND not a multiple of 128 elements. Pad to a lane-aligned
    # length and recurse into the aligned path (mish(0) == 0, so zero padding
    # is harmless); costs one extra HBM round-trip each way.
    padded_n = pl.cdiv(n, _LANES) * _LANES
    out = mish(jnp.pad(flat, (0, padded_n - n)), block_rows=block_rows)
    return out[:n].reshape(orig_shape)


def mish_ref(x):
    # Reference: stable softplus followed by tanh (matches torch semantics).
    xf = x.astype(jnp.float32)
    sp = jnp.maximum(xf, 0.0) + jnp.log1p(jnp.exp(-jnp.abs(xf)))
    return (xf * jnp.tanh(sp)).astype(x.dtype)


if __name__ == "__main__":
    k0, k1, k2 = jax.random.split(jax.random.PRNGKey(0), 3)

    # Primary shape implied by the module's typical NCHW use.
    x = jax.random.normal(k0, (2, 4, 16, 16), dtype=jnp.float32)
    y = jax.block_until_ready(mish(x))
    y_ref = mish_ref(x)
    assert y.shape == x.shape and y.dtype == x.dtype
    assert jnp.allclose(y, y_ref, atol=1e-5, rtol=1e-5), float(
        jnp.max(jnp.abs(y - y_ref)))

    # 128-aligned but rows not a multiple of the sublane count:
    # exercises the masked partial last block (no padding copies).
    x2 = jax.random.normal(k1, (2, 3, 5, 128), dtype=jnp.float32)
    y2 = jax.block_until_ready(mish(x2))
    assert jnp.allclose(y2, mish_ref(x2), atol=1e-5, rtol=1e-5)

    # Lane-unaligned element count: exercises the zero-copy (1, n) path.
    x3 = jax.random.normal(k2, (3, 5, 7), dtype=jnp.float32)
    y3 = jax.block_until_ready(mish(x3))
    assert jnp.allclose(y3, mish_ref(x3), atol=1e-5, rtol=1e-5)

    print("KERNEL_OK")
</pallas_src>

<mosaic_0001>
module attributes {stable_mosaic.version = 11 : i64} {
  func.func @_mish_kernel(%arg0: i32, %arg1: memref<16x128xf32, #tpu.memory_space<vmem>>, %arg2: memref<16x128xf32, #tpu.memory_space<vmem>>) attributes {dimension_semantics = [#tpu.dimension_semantics<parallel>], iteration_bounds = array<i64: 1>, scalar_prefetch = 0 : i64, scratch_operands = 0 : i64, tpu.core_type = #tpu.core_type<tc>, window_params = [{transform_indices = @transform_0, window_bounds = array<i64: 16, 128>}, {transform_indices = @transform_1, window_bounds = array<i64: 16, 128>}]} {
    %c0 = arith.constant 0 : index
    %c0_0 = arith.constant 0 : index
    %0 = vector.load %arg1[%c0, %c0_0] : memref<16x128xf32, #tpu.memory_space<vmem>>, vector<16x128xf32>
    %1 = math.absf %0 : vector<16x128xf32>
    %cst = arith.constant 0.000000e+00 : f32
    %2 = vector.broadcast %cst : f32 to vector<16x128xf32>
    %3 = arith.subf %2, %1 : vector<16x128xf32>
    %4 = math.exp %3 : vector<16x128xf32>
    %cst_1 = arith.constant 0.000000e+00 : f32
    %5 = vector.broadcast %cst_1 : f32 to vector<16x128xf32>
    %6 = arith.cmpf oge, %0, %5 : vector<16x128xf32>
    %7 = arith.addf %4, %4 : vector<16x128xf32>
    %8 = arith.mulf %4, %4 : vector<16x128xf32>
    %cst_2 = arith.constant 1.000000e+00 : f32
    %9 = vector.broadcast %cst_2 : f32 to vector<16x128xf32>
    %10 = arith.addf %9, %7 : vector<16x128xf32>
    %11 = arith.addf %8, %7 : vector<16x128xf32>
    %12 = arith.select %6, %10, %11 : vector<16x128xi1>, vector<16x128xf32>
    %cst_3 = arith.constant 1.000000e+00 : f32
    %13 = vector.broadcast %cst_3 : f32 to vector<16x128xf32>
    %14 = arith.select %6, %8, %13 : vector<16x128xi1>, vector<16x128xf32>
    %cst_4 = arith.constant 2.000000e+00 : f32
    %15 = vector.broadcast %cst_4 : f32 to vector<16x128xf32>
    %16 = arith.mulf %15, %14 : vector<16x128xf32>
    %17 = arith.addf %12, %16 : vector<16x128xf32>
    %18 = tpu.reciprocal %17 {approx = true} : vector<16x128xf32> -> vector<16x128xf32>
    %19 = arith.mulf %17, %18 : vector<16x128xf32>
    %cst_5 = arith.constant 2.000000e+00 : f32
    %20 = vector.broadcast %cst_5 : f32 to vector<16x128xf32>
    %21 = arith.subf %20, %19 : vector<16x128xf32>
    %22 = arith.mulf %18, %21 : vector<16x128xf32>
    %23 = arith.mulf %0, %12 : vector<16x128xf32>
    %24 = arith.mulf %23, %22 : vector<16x128xf32>
    %c0_6 = arith.constant 0 : index
    %c0_7 = arith.constant 0 : index
    %25 = vector.load %arg2[%c0_6, %c0_7] : memref<16x128xf32, #tpu.memory_space<vmem>>, vector<16x128xf32>
    tpu.vector_store %arg2[%c0_6, %c0_7], %24 {strides = array<i32>} : memref<16x128xf32, #tpu.memory_space<vmem>>, vector<16x128xf32>,
    return
  }
  func.func @transform_0(%arg0: i32) -> (i32, i32) {
    %c0_i32 = arith.constant 0 : i32
    %c0_i32_0 = arith.constant 0 : i32
    return %arg0, %c0_i32 : i32, i32
  }
  func.func @transform_1(%arg0: i32) -> (i32, i32) {
    %c0_i32 = arith.constant 0 : i32
    %c0_i32_0 = arith.constant 0 : i32
    return %arg0, %c0_i32 : i32, i32
  }
}

</mosaic_0001>

<llo_original>
// kernel: tpu_custom_call.1
$region0: #{tpu_custom_call.1}
  #allocation0 [shape = 'u32[]', space=smem, size = 0x4, offset = 0x4, fixed_abs, tag = 'smem constant byte address 0x4 - core index']
  #allocation1 [shape = 'u32[144,128]{1,0:T(1,128)}', space=vmem, size = 0x12000, scoped, tag = 'internal scratch']
  %s0 = inlined_call_operand.hbm [shape: f32[16,128], index: 0, kind: input, shape index: {}]
  %s1 = inlined_call_operand.hbm [shape: f32[16,128], index: 1, kind: output, shape index: {}]
  %s2 = sld [smem:[#allocation0]]
  $region18: #{tpu_custom_call.1} parent=0
    _
  %s4 = ssub.s32 1, %s2
  %s5 = scalar_select 0, %s4, %s2
  $region1: #{tpu_custom_call.1} parent=0
    #allocation2 [shape = 'u8[8192]{0}', space=vmem, size = 0x2000, scoped, tag = 'input window, operand 0, single buffered']
    #allocation3 [shape = 's32[1]{0}', space=sflag, size = 0x4, scoped, tag = 'scoped memory for tpu_custom_call.1']
    #allocation4 [shape = 's32[1]{0}', space=sflag, size = 0x4, scoped, tag = 'scoped memory for tpu_custom_call.1']
    #allocation5 [shape = 'u8[8192]{0}', space=vmem, size = 0x2000, scoped, tag = 'output window, operand 0, single buffered']
    %6 = vsyncpa [#allocation3], 0
    %7 = vsyncpa [#allocation4], 0
    // Predicated region
    $region2: #{tpu_custom_call.1} parent=1 // pred_check
      _
    $region3: #{tpu_custom_call.1} parent=1 // pred_check_branch
      %9 = sbr.rel (0) target = $region5
    $region4: #{tpu_custom_call.1} parent=1 // pred_region
      %s11 = ssub.s32 256, 256
      %12 = vsyncadd [#allocation3], %s11
      %s13 = sshll.u32 [#allocation2], 4
      %s14 = int_to_ptr.vmem [resolvable:$true] %s13
      %19 = dma.hbm_to_vmem [thread:$0]  %s0, 256, %s14, [#allocation3], 128, 128, 8
    $region5: #{tpu_custom_call.1} parent=1 // pred_fallthru
      _
    // Predicated region
    $region6: #{tpu_custom_call.1} parent=1 // pred_check
      _
    $region7: #{tpu_custom_call.1} parent=1 // pred_check_branch
      %21 = sbr.rel (0) target = $region9
    $region8: #{tpu_custom_call.1} parent=1 // pred_region
      %22 = dma.done [#allocation3], 256
    $region9: #{tpu_custom_call.1} parent=1 // pred_fallthru
      _
    %v23 = vld [vmem:[#allocation2] sm:$0xff]
    %v24 = vld [vmem:[#allocation2 + $0x8] sm:$0xff]
    %v25 = vand.u32 2147483647, %v23
    %v26 = vand.u32 2147483647, %v24
    %v27 = vsub.f32 0.0, %v25
    %v28 = vsub.f32 0.0, %v26
    %v29 = vmul.f32 %v27, 1.442695
    %v30 = vpow.pop %v29
    %v31 = vmul.f32 %v28, 1.442695
    %v32 = vpow.pop %v31
    %vm33 = vcmp.ge.f32.partialorder %v23, 0.0
    %vm34 = vcmp.ge.f32.partialorder %v24, 0.0
    %v35 = vadd.f32 %v30, %v30
    %v36 = vadd.f32 %v32, %v32
    %v37 = vmul.f32 %v30, %v30
    %v38 = vmul.f32 %v32, %v32
    %v39 = vadd.f32 %v35, 1.0
    %v40 = vadd.f32 %v36, 1.0
    %v41 = vadd.f32 %v37, %v35
    %v42 = vadd.f32 %v38, %v36
    %v43 = vsel %vm33, %v39, %v41
    %v44 = vsel %vm34, %v40, %v42
    %v45 = vsel %vm33, %v37, 1.0
    %v46 = vsel %vm34, %v38, 1.0
    %v47 = vmul.f32 %v45, 2.0
    %v48 = vmul.f32 %v46, 2.0
    %v49 = vadd.f32 %v43, %v47
    %v50 = vadd.f32 %v44, %v48
    %v51 = vrcp.pop %v49
    %v52 = vrcp.pop %v50
    %v53 = vmul.f32 %v49, %v51
    %v54 = vmul.f32 %v50, %v52
    %v55 = vsub.f32 2.0, %v53
    %v56 = vsub.f32 2.0, %v54
    %v57 = vmul.f32 %v51, %v55
    %v58 = vmul.f32 %v52, %v56
    %v59 = vmul.f32 %v23, %v43
    %v60 = vmul.f32 %v24, %v44
    %v61 = vmul.f32 %v59, %v57
    %v62 = vmul.f32 %v60, %v58
    %63 = vst [vmem:[#allocation5] sm:$0xff] %v61
    %64 = vst [vmem:[#allocation5 + $0x8] sm:$0xff] %v62
    // Predicated region
    $region10: #{tpu_custom_call.1} parent=1 // pred_check
      _
    $region11: #{tpu_custom_call.1} parent=1 // pred_check_branch
      %66 = sbr.rel (0) target = $region13
    $region12: #{tpu_custom_call.1} parent=1 // pred_region
      %s68 = ssub.s32 256, 256
      %69 = vsyncadd [#allocation4], %s68
      %s70 = sshll.u32 [#allocation5], 4
      %s71 = int_to_ptr.vmem [resolvable:$true] %s70
      %76 = dma.vmem_to_hbm [thread:$0]  %s71, 256, %s1, [#allocation4], 128, 128, 8
    $region13: #{tpu_custom_call.1} parent=1 // pred_fallthru
      _
    // Predicated region
    $region14: #{tpu_custom_call.1} parent=1 // pred_check
      _
    $region15: #{tpu_custom_call.1} parent=1 // pred_check_branch
      %78 = sbr.rel (0) target = $region17
    $region16: #{tpu_custom_call.1} parent=1 // pred_region
      %79 = dma.done [#allocation4], 256
    $region17: #{tpu_custom_call.1} parent=1 // pred_fallthru
      _
    %80 = vsyncpa [#allocation3], 1
    %81 = vsyncpa [#allocation4], 1

</llo_original>
